<compile_context>
chip_gen: v7x
topology: tpu7x:2x2x1
jax: 0.10.0
libtpu: 0.0.40
codegen_flags: <defaults>
</compile_context>

<pallas_src>
import functools

import jax
import jax.numpy as jnp
from jax.experimental import pallas as pl
from jax.experimental.pallas import tpu as pltpu

_LANE = 128
_SUBLANE = 8
_MAX_TM_REDUCE = 4096      # rows/tile, sum|mean path: 2 MiB f32 per stream per buffer
_MAX_TM_ELEM = 2048        # rows/tile, 'none' path: 3 streams, ~6 MiB double-buffered
_VMEM_LIMIT = 48 * 1024 * 1024


def _round_up(x: int, m: int) -> int:
    return -(-x // m) * m


def _lane_dense(flat):
    """(n,) -> (rows, 128) with rows a multiple of 8.

    Pure (free) reshape when n is already a multiple of 8*128; otherwise a single
    small tail pad.  Kernels mask the padded / OOB tail themselves, so the pad
    value is irrelevant.
    """
    n = flat.shape[0]
    rows = _round_up(max(-(-n // _LANE), 1), _SUBLANE)
    padded = rows * _LANE
    if padded != n:
        flat = jnp.pad(flat, (0, padded - n))
    return flat.reshape(rows, _LANE), rows


def _mask_tail_elems(vals, n_valid, tm):
    """Zero elements whose flat index is >= n_valid (pad / out-of-bounds tail)."""
    i = pl.program_id(0)
    row = jax.lax.broadcasted_iota(jnp.int32, vals.shape, 0)
    lane = jax.lax.broadcasted_iota(jnp.int32, vals.shape, 1)
    gidx = (i * tm + row) * _LANE + lane
    return jnp.where(gidx < n_valid, vals, 0.0)


def _hinge_partial_kernel(out_ref, tgt_ref, part_ref, *, n_valid, tm, mask_tail):
    # relu(1 - t*y) in f32 on the VPU; inputs kept in native dtype in HBM.
    y = out_ref[...].astype(jnp.float32)
    t = tgt_ref[...].astype(jnp.float32)
    loss = jnp.maximum(1.0 - t * y, 0.0)
    if mask_tail:
        loss = _mask_tail_elems(loss, n_valid, tm)
    # (tm,128) -> (tm//8, 8, 128), sum over the leading axis = whole-vreg adds.
    # One lane-dense (8,128) partial per grid block, no accumulator carry, so the
    # grid axis stays "parallel" (megacore-shards on v7x).
    part_ref[...] = jnp.sum(loss.reshape(tm // _SUBLANE, _SUBLANE, _LANE), axis=0)


def _sq_partial_kernel(w_ref, part_ref, *, n_valid, tm, mask_tail):
    w = w_ref[...].astype(jnp.float32)
    sq = w * w
    if mask_tail:
        sq = _mask_tail_elems(sq, n_valid, tm)
    part_ref[...] = jnp.sum(sq.reshape(tm // _SUBLANE, _SUBLANE, _LANE), axis=0)


def _hinge_elem_kernel(out_ref, tgt_ref, loss_ref):
    y = out_ref[...].astype(jnp.float32)
    t = tgt_ref[...].astype(jnp.float32)
    loss_ref[...] = jnp.maximum(1.0 - t * y, 0.0).astype(loss_ref.dtype)


def _blockwise_sum(kernel_fn, inputs, rows, n_valid, max_tm):
    """Tiled, pipelined partial sums -> f32 scalar (tiny finalize in XLA)."""
    tm = rows if rows <= max_tm else max_tm
    nblk = -(-rows // tm)
    mask_tail = (rows % tm != 0) or (rows * _LANE != n_valid)
    kern = functools.partial(kernel_fn, n_valid=n_valid, tm=tm, mask_tail=mask_tail)
    in_spec = pl.BlockSpec((tm, _LANE), lambda i: (i, 0))
    parts = pl.pallas_call(
        kern,
        out_shape=jax.ShapeDtypeStruct((nblk * _SUBLANE, _LANE), jnp.float32),
        grid=(nblk,),
        in_specs=[in_spec] * len(inputs),
        out_specs=pl.BlockSpec((_SUBLANE, _LANE), lambda i: (i, 0)),
        compiler_params=pltpu.CompilerParams(
            dimension_semantics=("parallel",),
            vmem_limit_bytes=_VMEM_LIMIT),
    )(*inputs)
    return jnp.sum(parts, dtype=jnp.float32)


def hinge_loss(output, target, weights=None, *, reduction: str = "mean",
               is_soft: bool = False, C: float = 1.0):
    """Pallas forward pass matching Hinge.forward(output, target, weights)."""
    output = jnp.squeeze(output)
    if output.shape != target.shape:
        output, target = jnp.broadcast_arrays(output, target)
    out_dtype = jnp.promote_types(output.dtype, target.dtype)
    loss_shape = output.shape

    out_flat = output.reshape(-1)
    tgt_flat = target.reshape(-1)
    n = out_flat.shape[0]
    out2d, rows = _lane_dense(out_flat)
    tgt2d, _ = _lane_dense(tgt_flat)

    if reduction == "none":
        tm = rows if rows <= _MAX_TM_ELEM else _MAX_TM_ELEM
        nblk = -(-rows // tm)
        spec = pl.BlockSpec((tm, _LANE), lambda i: (i, 0))
        loss2d = pl.pallas_call(
            _hinge_elem_kernel,
            out_shape=jax.ShapeDtypeStruct((rows, _LANE), out_dtype),
            grid=(nblk,),
            in_specs=[spec, spec],
            out_specs=spec,
            compiler_params=pltpu.CompilerParams(
                dimension_semantics=("parallel",),
                vmem_limit_bytes=_VMEM_LIMIT),
        )(out2d, tgt2d)
        # Identity (elided by XLA) when n is already a multiple of 8*128.
        hinge = loss2d.reshape(-1)[:n].reshape(loss_shape)
    else:
        total = _blockwise_sum(_hinge_partial_kernel, (out2d, tgt2d), rows, n,
                               _MAX_TM_REDUCE)
        scale = (1.0 / max(n, 1)) if reduction == "mean" else 1.0
        hinge = total * scale

    if not is_soft:
        return hinge
    if weights is None:
        raise ValueError("Weight must be provided for soft-margin classification!")

    w_flat = weights.reshape(-1)
    w2d, rows_w = _lane_dense(w_flat)
    reg = 0.5 * _blockwise_sum(_sq_partial_kernel, (w2d,), rows_w,
                               w_flat.shape[0], _MAX_TM_REDUCE)
    # TODO(synk): fold the weight-norm partials into the hinge reduce launch to
    # save one kernel dispatch on the soft-margin path.
    return reg + C * hinge


def _ref_hinge(output, target, weights, reduction, is_soft, C):
    loss = jnp.maximum(1.0 - target * jnp.squeeze(output), 0.0)
    if reduction == "mean":
        h = loss.mean()
    elif reduction == "sum":
        h = loss.sum()
    else:
        h = loss
    if is_soft:
        return 0.5 * jnp.linalg.norm(weights) ** 2 + C * h
    return h


if __name__ == "__main__":
    key = jax.random.PRNGKey(0)
    k_out, k_tgt, k_w = jax.random.split(key, 3)

    batch, in_dims = 128, 32
    output = jax.random.normal(k_out, (batch, 1), dtype=jnp.float32)
    target = jax.random.bernoulli(k_tgt, 0.5, (batch,)).astype(jnp.float32) * 2.0 - 1.0
    weights = jax.random.normal(k_w, (in_dims,), dtype=jnp.float32)

    # --- reduction='mean' (default, hard margin) ---
    y = jax.block_until_ready(hinge_loss(output, target, reduction="mean"))
    ref = _ref_hinge(output, target, None, "mean", False, 1.0)
    assert jnp.allclose(y, ref, atol=1e-5, rtol=1e-5)

    # --- reduction='sum' ---
    y = jax.block_until_ready(hinge_loss(output, target, reduction="sum"))
    ref = _ref_hinge(output, target, None, "sum", False, 1.0)
    assert jnp.allclose(y, ref, atol=1e-5, rtol=1e-5)

    # --- reduction='none' ---
    y = jax.block_until_ready(hinge_loss(output, target, reduction="none"))
    ref = _ref_hinge(output, target, None, "none", False, 1.0)
    assert y.shape == (batch,)
    assert jnp.allclose(y, ref, atol=1e-5, rtol=1e-5)

    # --- soft-margin SVM: 0.5*||w||^2 + C * mean hinge ---
    y = jax.block_until_ready(
        hinge_loss(output, target, weights, reduction="mean", is_soft=True, C=0.5))
    ref = _ref_hinge(output, target, weights, "mean", True, 0.5)
    assert jnp.allclose(y, ref, atol=1e-5, rtol=1e-5)

    print("KERNEL_OK")
</pallas_src>

<mosaic_0001>
module attributes {stable_mosaic.version = 11 : i64} {
  func.func @_hinge_partial_kernel(%arg0: i32, %arg1: memref<8x128xf32, #tpu.memory_space<vmem>>, %arg2: memref<8x128xf32, #tpu.memory_space<vmem>>, %arg3: memref<8x128xf32, #tpu.memory_space<vmem>>) attributes {dimension_semantics = [#tpu.dimension_semantics<parallel>], iteration_bounds = array<i64: 1>, scalar_prefetch = 0 : i64, scratch_operands = 0 : i64, tpu.core_type = #tpu.core_type<tc>, window_params = [{transform_indices = @transform_0, window_bounds = array<i64: 8, 128>}, {transform_indices = @transform_1, window_bounds = array<i64: 8, 128>}, {transform_indices = @transform_2, window_bounds = array<i64: 8, 128>}]} {
    %c0 = arith.constant 0 : index
    %c0_0 = arith.constant 0 : index
    %0 = vector.load %arg1[%c0, %c0_0] : memref<8x128xf32, #tpu.memory_space<vmem>>, vector<8x128xf32>
    %c0_1 = arith.constant 0 : index
    %c0_2 = arith.constant 0 : index
    %1 = vector.load %arg2[%c0_1, %c0_2] : memref<8x128xf32, #tpu.memory_space<vmem>>, vector<8x128xf32>
    %2 = arith.mulf %1, %0 : vector<8x128xf32>
    %cst = arith.constant 1.000000e+00 : f32
    %3 = vector.broadcast %cst : f32 to vector<8x128xf32>
    %4 = arith.subf %3, %2 : vector<8x128xf32>
    %cst_3 = arith.constant 0.000000e+00 : f32
    %5 = vector.broadcast %cst_3 : f32 to vector<8x128xf32>
    %6 = arith.maximumf %4, %5 : vector<8x128xf32>
    %7 = tpu.iota {dimensions = array<i32: 0>} : vector<8x128xi32>
    %8 = tpu.iota {dimensions = array<i32: 1>} : vector<8x128xi32>
    %c8_i32 = arith.constant 8 : i32
    %9 = arith.muli %arg0, %c8_i32 : i32
    %10 = vector.broadcast %9 : i32 to vector<8x128xi32>
    %11 = arith.addi %10, %7 : vector<8x128xi32>
    %c128_i32 = arith.constant 128 : i32
    %12 = vector.broadcast %c128_i32 : i32 to vector<8x128xi32>
    %13 = arith.muli %11, %12 : vector<8x128xi32>
    %14 = arith.addi %13, %8 : vector<8x128xi32>
    %c128_i32_4 = arith.constant 128 : i32
    %15 = vector.broadcast %c128_i32_4 : i32 to vector<8x128xi32>
    %16 = arith.cmpi slt, %14, %15 : vector<8x128xi32>
    %cst_5 = arith.constant 0.000000e+00 : f32
    %17 = vector.broadcast %cst_5 : f32 to vector<8x128xf32>
    %18 = arith.select %16, %6, %17 : vector<8x128xi1>, vector<8x128xf32>
    %19 = vector.shape_cast %18 : vector<8x128xf32> to vector<1x8x128xf32>
    %cst_6 = arith.constant dense<0.000000e+00> : vector<8x128xf32>
    %20 = vector.multi_reduction <add>, %19, %cst_6 [0] : vector<1x8x128xf32> to vector<8x128xf32>
    %c0_7 = arith.constant 0 : index
    %c0_8 = arith.constant 0 : index
    %21 = vector.load %arg3[%c0_7, %c0_8] : memref<8x128xf32, #tpu.memory_space<vmem>>, vector<8x128xf32>
    tpu.vector_store %arg3[%c0_7, %c0_8], %20 {strides = array<i32>} : memref<8x128xf32, #tpu.memory_space<vmem>>, vector<8x128xf32>,
    return
  }
  func.func @transform_0(%arg0: i32) -> (i32, i32) {
    %c0_i32 = arith.constant 0 : i32
    %c0_i32_0 = arith.constant 0 : i32
    return %arg0, %c0_i32 : i32, i32
  }
  func.func @transform_1(%arg0: i32) -> (i32, i32) {
    %c0_i32 = arith.constant 0 : i32
    %c0_i32_0 = arith.constant 0 : i32
    return %arg0, %c0_i32 : i32, i32
  }
  func.func @transform_2(%arg0: i32) -> (i32, i32) {
    %c0_i32 = arith.constant 0 : i32
    %c0_i32_0 = arith.constant 0 : i32
    return %arg0, %c0_i32 : i32, i32
  }
}

</mosaic_0001>

<llo_original>
// kernel: tpu_custom_call.1
$region0: #{tpu_custom_call.1}
  #allocation0 [shape = 'u32[]', space=smem, size = 0x4, offset = 0x4, fixed_abs, tag = 'smem constant byte address 0x4 - core index']
  #allocation1 [shape = 'u32[144,128]{1,0:T(1,128)}', space=vmem, size = 0x12000, scoped, tag = 'internal scratch']
  %s0 = inlined_call_operand.hbm [shape: f32[8,128], index: 0, kind: input, shape index: {}]
  %s1 = inlined_call_operand.hbm [shape: f32[8,128], index: 1, kind: input, shape index: {}]
  %s2 = inlined_call_operand.hbm [shape: f32[8,128], index: 2, kind: output, shape index: {}]
  %s3 = sld [smem:[#allocation0]]
  $region26: #{tpu_custom_call.1} parent=0
    _
  %s5 = ssub.s32 1, %s3
  %s6 = scalar_select 0, %s5, %s3
  $region1: #{tpu_custom_call.1} parent=0
    #allocation2 [shape = 'u8[4096]{0}', space=vmem, size = 0x1000, scoped, tag = 'input window, operand 0, single buffered']
    #allocation3 [shape = 's32[1]{0}', space=sflag, size = 0x4, scoped, tag = 'scoped memory for tpu_custom_call.1']
    #allocation4 [shape = 's32[1]{0}', space=sflag, size = 0x4, scoped, tag = 'scoped memory for tpu_custom_call.1']
    #allocation5 [shape = 'u8[4096]{0}', space=vmem, size = 0x1000, scoped, tag = 'input window, operand 1, single buffered']
    #allocation6 [shape = 's32[1]{0}', space=sflag, size = 0x4, scoped, tag = 'scoped memory for tpu_custom_call.1']
    #allocation7 [shape = 'u8[4096]{0}', space=vmem, size = 0x1000, scoped, tag = 'output window, operand 0, single buffered']
    %7 = vsyncpa [#allocation3], 0
    %8 = vsyncpa [#allocation6], 0
    %9 = vsyncpa [#allocation4], 0
    // Predicated region
    $region2: #{tpu_custom_call.1} parent=1 // pred_check
      _
    $region3: #{tpu_custom_call.1} parent=1 // pred_check_branch
      %11 = sbr.rel (0) target = $region5
    $region4: #{tpu_custom_call.1} parent=1 // pred_region
      %s13 = ssub.s32 128, 128
      %14 = vsyncadd [#allocation3], %s13
      %s16 = sshll.u32 [#allocation2], 4
      %s17 = int_to_ptr.vmem [resolvable:$true] %s16
      %19 = dma.hbm_to_vmem [thread:$0]  %s0, 128, %s17, [#allocation3]
    $region5: #{tpu_custom_call.1} parent=1 // pred_fallthru
      _
    // Predicated region
    $region6: #{tpu_custom_call.1} parent=1 // pred_check
      _
    $region7: #{tpu_custom_call.1} parent=1 // pred_check_branch
      %21 = sbr.rel (0) target = $region9
    $region8: #{tpu_custom_call.1} parent=1 // pred_region
      %s23 = ssub.s32 128, 128
      %24 = vsyncadd [#allocation6], %s23
      %s26 = sshll.u32 [#allocation5], 4
      %s27 = int_to_ptr.vmem [resolvable:$true] %s26
      %29 = dma.hbm_to_vmem [thread:$0]  %s1, 128, %s27, [#allocation6]
    $region9: #{tpu_custom_call.1} parent=1 // pred_fallthru
      _
    // Predicated region
    $region10: #{tpu_custom_call.1} parent=1 // pred_check
      _
    $region11: #{tpu_custom_call.1} parent=1 // pred_check_branch
      %31 = sbr.rel (0) target = $region13
    $region12: #{tpu_custom_call.1} parent=1 // pred_region
      %32 = dma.done [#allocation3], 128
    $region13: #{tpu_custom_call.1} parent=1 // pred_fallthru
      _
    // Predicated region
    $region14: #{tpu_custom_call.1} parent=1 // pred_check
      _
    $region15: #{tpu_custom_call.1} parent=1 // pred_check_branch
      %34 = sbr.rel (0) target = $region17
    $region16: #{tpu_custom_call.1} parent=1 // pred_region
      %35 = dma.done [#allocation6], 128
    $region17: #{tpu_custom_call.1} parent=1 // pred_fallthru
      _
    %v36 = vld [vmem:[#allocation2] sm:$0xff]
    %v37 = vld [vmem:[#allocation5] sm:$0xff]
    %v38 = vmul.f32 %v37, %v36
    %v39 = vsub.f32 1.0, %v38
    %v40 = vmax.f32 %v39, 0.0
    %v41 = vlaneseq
    %v42 = vshrl.u32 %v41, 7
    %v43 = vlaneseq
    %v44 = vand.u32 %v43, 127
    %s45 = smul.u32 0, 8
    %v46 = vstv %s45
    %v47 = vadd.s32 %v46, %v42
    %v48 = vmul.u32 %v47, 128
    %v49 = vadd.s32 %v48, %v44
    %vm50 = vcmp.lt.s32.totalorder %v49, 128
    %v51 = vsel %vm50, %v40, 0.0
    %v52 = vadd.f32 %v51, 0.0
    %53 = vst [vmem:[#allocation7] sm:$0xff] %v52
    // Predicated region
    $region18: #{tpu_custom_call.1} parent=1 // pred_check
      _
    $region19: #{tpu_custom_call.1} parent=1 // pred_check_branch
      %55 = sbr.rel (0) target = $region21
    $region20: #{tpu_custom_call.1} parent=1 // pred_region
      %s57 = ssub.s32 128, 128
      %58 = vsyncadd [#allocation4], %s57
      %s60 = sshll.u32 [#allocation7], 4
      %s61 = int_to_ptr.vmem [resolvable:$true] %s60
      %63 = dma.vmem_to_hbm [thread:$0]  %s61, 128, %s2, [#allocation4]
    $region21: #{tpu_custom_call.1} parent=1 // pred_fallthru
      _
    // Predicated region
    $region22: #{tpu_custom_call.1} parent=1 // pred_check
      _
    $region23: #{tpu_custom_call.1} parent=1 // pred_check_branch
      %65 = sbr.rel (0) target = $region25
    $region24: #{tpu_custom_call.1} parent=1 // pred_region
      %66 = dma.done [#allocation4], 128
    $region25: #{tpu_custom_call.1} parent=1 // pred_fallthru
      _
    %67 = vsyncpa [#allocation3], 1
    %68 = vsyncpa [#allocation6], 1
    %69 = vsyncpa [#allocation4], 1

</llo_original>
